<compile_context>
chip_gen: v7x
topology: tpu7x:2x2x1
jax: 0.10.0
libtpu: 0.0.40
codegen_flags: <defaults>
</compile_context>

<pallas_src>
import numpy as np
import jax
import jax.numpy as jnp
from jax.experimental import pallas as pl
from jax.experimental.pallas import tpu as pltpu


# ----------------------------------------------------------------------------- helpers
def _round_up(n, m):
    return ((n + m - 1) // m) * m


# ----------------------------------------------------------------------------- params
def init_prelu_layers_params(sizes, key):
    """Torch-layout parameters matching the module.

    Linear weights ~ N(0, 0.02), biases = 0 (mirrors _init_weights), PReLU alpha = 0.25.
    Returns a list of (w [out,in], b [out], alpha [out], apply_prelu).
    """
    params = []
    n_layers = len(sizes) - 1
    for li, (m, n) in enumerate(zip(sizes[:-1], sizes[1:])):
        key, wk = jax.random.split(key)
        w = 0.02 * jax.random.normal(wk, (n, m), dtype=jnp.float32)   # [out, in]
        b = jnp.zeros((n,), dtype=jnp.float32)
        alpha = jnp.full((n,), 0.25, dtype=jnp.float32)
        params.append((w, b, alpha, li < n_layers - 1))               # last PReLU popped
    return params


def prepare_fused_params(sizes, params):
    """One-time prep for the fused kernel.

    * W transposed to [in,out]; OUT dims zero-padded to multiples of 128 (lane-dense);
      layer-0 IN dim keeps the real s0 (no K inflation), deeper IN dims match the
      padded width of the previous activation.
    * Zero padding is exact: padded output channels see zero weight columns + zero bias,
      PReLU(0)=0, and they hit zero weight rows downstream, so they stay identically 0.
    * W stored as bfloat16 (MXU-native); bias/alpha stay f32 (applied post f32 accumulate).
    # TODO(synk): if hidden sizes grow past 128, pad feature dims to 256 on v6e/v7x
    # (2x256^2 MXU) and switch to tiled weights (emit_pipeline) once resident params
    # exceed ~48 MiB on v7x / ~100 MiB on v5e/v6e instead of keeping the chain resident.
    """
    padded = [sizes[0]] + [_round_up(s, 128) for s in sizes[1:]]      # padded[0] == s0
    fused = []
    for li, (w, b, alpha, apply_prelu) in enumerate(params):
        n_out, n_in = w.shape
        in_p = sizes[0] if li == 0 else padded[li]
        out_p = padded[li + 1]
        w_t = jnp.zeros((in_p, out_p), dtype=jnp.float32)
        w_t = w_t.at[:n_in, :n_out].set(jnp.transpose(w)).astype(jnp.bfloat16)
        b_p = jnp.zeros((1, out_p), dtype=jnp.float32).at[0, :n_out].set(b)
        a_p = (jnp.zeros((1, out_p), dtype=jnp.float32).at[0, :n_out].set(alpha)
               if apply_prelu else None)
        fused.append((w_t, b_p, a_p, apply_prelu))
    return padded, fused


# ----------------------------------------------------------------------------- kernel
def _make_fused_kernel(prelu_flags):
    """Kernel body for the whole MLP. Ref order: x, (w, b, [alpha]) per layer, out."""
    def kernel(*refs):
        x_ref, o_ref = refs[0], refs[-1]
        y = x_ref[...].astype(jnp.float32)
        idx = 1
        for has_prelu in prelu_flags:
            w = refs[idx][...]                       # bf16 [K, N]
            b = refs[idx + 1][...]                   # f32  (1, N) broadcasts over batch
            idx += 2
            y = jnp.dot(y.astype(jnp.bfloat16), w,
                        preferred_element_type=jnp.float32) + b
            if has_prelu:
                a = refs[idx][...]                   # f32 (1, N) per-channel slope
                idx += 1
                y = jnp.where(y > 0, y, a * y)
        o_ref[...] = y.astype(o_ref.dtype)
    return kernel


def _pick_batch_tile(B, widths, tb_cap=256):
    """Batch tile: multiple of 8 sublanes, <= tb_cap, and small enough that the live f32
    activation (TB x widest layer) stays under ~half the 256 KiB vreg file (avoids spills).
    Prefer >=2 grid steps when batch allows so ('parallel',) uses both v7x TensorCores."""
    max_w = max(widths)
    act_cap = max(8, ((256 * 1024 // 2) // (max_w * 4)) // 8 * 8)
    tb = max(8, min(_round_up(B, 8), tb_cap, act_cap) // 8 * 8)
    b_pad = _round_up(B, tb)
    if b_pad // tb < 2 and b_pad >= 16:
        tb = max(8, _round_up(b_pad // 2, 8))
        b_pad = _round_up(B, tb)
    return tb, b_pad


def prelu_layers_fused_forward(x, sizes, padded_sizes, fused_params, *, tb=256):
    """Forward pass: the whole MLP in one pallas_call, grid over the batch axis."""
    B, s0 = x.shape
    assert s0 == sizes[0]
    P = padded_sizes                                 # P[0] == s0 (input kept unpadded)

    TB, B_pad = _pick_batch_tile(B, P, tb_cap=tb)
    x_in = x if B_pad == B else jnp.pad(x, ((0, B_pad - B), (0, 0)))   # only when needed
    grid = (B_pad // TB,)

    prelu_flags = tuple(p[3] for p in fused_params)
    inputs = [x_in]
    for (w_t, b_p, a_p, apply_prelu) in fused_params:
        inputs.append(w_t)
        inputs.append(b_p)
        if apply_prelu:
            inputs.append(a_p)

    def _param_nbytes():
        n = 0
        for (w_t, b_p, a_p, apply_prelu) in fused_params:
            n += w_t.size * 2 + b_p.size * 4 + (a_p.size * 4 if apply_prelu else 0)
        return n

    def _vmem_limit(param_buffers):
        # Actual footprint + headroom — never request the whole physical VMEM (v7x = 64 MiB/TC).
        need = (param_buffers * _param_nbytes()
                + 2 * TB * (P[0] + P[-1]) * 4        # double-buffered x / out tiles
                + 4 * TB * max(P) * 4)               # live activation working set
        try:
            cap = pltpu.get_tpu_info().vmem_capacity_bytes
        except Exception:
            cap = 64 << 20
        return int(max(4 << 20, min(2 * need, (cap * 3) // 4)))

    def _run(single_buffer_params):
        def _resident(block_shape):
            # Constant-index resident params never change blocks: single-buffer them
            # to halve their VMEM footprint (matters on v7x's 64 MiB).
            if single_buffer_params:
                return pl.BlockSpec(block_shape, lambda i: (0, 0),
                                    pipeline_mode=pl.Buffered(1))
            return pl.BlockSpec(block_shape, lambda i: (0, 0))

        in_specs = [pl.BlockSpec((TB, P[0]), lambda i: (i, 0))]        # x tile moves
        for (w_t, b_p, a_p, apply_prelu) in fused_params:
            in_specs.append(_resident(w_t.shape))
            in_specs.append(_resident(b_p.shape))
            if apply_prelu:
                in_specs.append(_resident(a_p.shape))

        return pl.pallas_call(
            _make_fused_kernel(prelu_flags),
            out_shape=jax.ShapeDtypeStruct((B_pad, P[-1]), jnp.float32),
            grid=grid,
            in_specs=in_specs,
            out_specs=pl.BlockSpec((TB, P[-1]), lambda i: (i, 0)),
            compiler_params=pltpu.CompilerParams(
                dimension_semantics=("parallel",),
                vmem_limit_bytes=_vmem_limit(1 if single_buffer_params else 2),
            ),
        )(*inputs)

    try:
        out_p = _run(True)
    except Exception:
        # pipeline_mode=pl.Buffered(1) unsupported on this jax build: default buffering.
        out_p = _run(False)

    return out_p[:B, :sizes[-1]]


# ----------------------------------------------------------------------------- reference
def _reference_forward(x, params):
    """Pure-JAX f32 reference replicating torch semantics exactly (unpadded)."""
    y = x
    for (w, b, alpha, apply_prelu) in params:
        y = y @ w.T + b
        if apply_prelu:
            y = jnp.where(y > 0, y, alpha[None, :] * y)
    return y


# ----------------------------------------------------------------------------- main
if __name__ == "__main__":
    sizes = [32, 64, 32, 16]   # small MLP consistent with the module's constructor
    batch = 8

    key = jax.random.PRNGKey(0)
    key, xk = jax.random.split(key)
    x = jax.random.normal(xk, (batch, sizes[0]), dtype=jnp.float32)

    params = init_prelu_layers_params(sizes, key)
    padded_sizes, fused_params = prepare_fused_params(sizes, params)   # one-time prep

    out = prelu_layers_fused_forward(x, sizes, padded_sizes, fused_params)
    out = jax.block_until_ready(out)

    ref = _reference_forward(x, params)
    assert out.shape == (batch, sizes[-1])
    # bf16 MXU operands (f32 accumulation) => relaxed tolerance vs the pure-f32 reference.
    assert np.allclose(np.asarray(out), np.asarray(ref), rtol=2e-2, atol=2e-3)

    print("KERNEL_OK")
</pallas_src>

<mosaic_0001>
module attributes {stable_mosaic.version = 11 : i64} {
  func.func @kernel(%arg0: i32, %arg1: memref<8x32xf32, #tpu.memory_space<vmem>>, %arg2: memref<32x128xbf16, #tpu.memory_space<vmem>>, %arg3: memref<1x128xf32, #tpu.memory_space<vmem>>, %arg4: memref<1x128xf32, #tpu.memory_space<vmem>>, %arg5: memref<128x128xbf16, #tpu.memory_space<vmem>>, %arg6: memref<1x128xf32, #tpu.memory_space<vmem>>, %arg7: memref<1x128xf32, #tpu.memory_space<vmem>>, %arg8: memref<128x128xbf16, #tpu.memory_space<vmem>>, %arg9: memref<1x128xf32, #tpu.memory_space<vmem>>, %arg10: memref<8x128xf32, #tpu.memory_space<vmem>>) attributes {dimension_semantics = [#tpu.dimension_semantics<parallel>], iteration_bounds = array<i64: 1>, scalar_prefetch = 0 : i64, scratch_operands = 0 : i64, tpu.core_type = #tpu.core_type<tc>, window_params = [{transform_indices = @transform_0, window_bounds = array<i64: 8, 32>}, {pipeline_mode = #tpu.pipeline_mode<synchronous>, transform_indices = @transform_1, window_bounds = array<i64: 32, 128>}, {pipeline_mode = #tpu.pipeline_mode<synchronous>, transform_indices = @transform_2, window_bounds = array<i64: 1, 128>}, {pipeline_mode = #tpu.pipeline_mode<synchronous>, transform_indices = @transform_3, window_bounds = array<i64: 1, 128>}, {pipeline_mode = #tpu.pipeline_mode<synchronous>, transform_indices = @transform_4, window_bounds = array<i64: 128, 128>}, {pipeline_mode = #tpu.pipeline_mode<synchronous>, transform_indices = @transform_5, window_bounds = array<i64: 1, 128>}, {pipeline_mode = #tpu.pipeline_mode<synchronous>, transform_indices = @transform_6, window_bounds = array<i64: 1, 128>}, {pipeline_mode = #tpu.pipeline_mode<synchronous>, transform_indices = @transform_7, window_bounds = array<i64: 128, 128>}, {pipeline_mode = #tpu.pipeline_mode<synchronous>, transform_indices = @transform_8, window_bounds = array<i64: 1, 128>}, {transform_indices = @transform_9, window_bounds = array<i64: 8, 128>}]} {
    %c0 = arith.constant 0 : index
    %c0_0 = arith.constant 0 : index
    %0 = vector.load %arg1[%c0, %c0_0] : memref<8x32xf32, #tpu.memory_space<vmem>>, vector<8x32xf32>
    %c0_1 = arith.constant 0 : index
    %c0_2 = arith.constant 0 : index
    %1 = vector.load %arg2[%c0_1, %c0_2] : memref<32x128xbf16, #tpu.memory_space<vmem>>, vector<32x128xbf16>
    %c0_3 = arith.constant 0 : index
    %c0_4 = arith.constant 0 : index
    %2 = vector.load %arg3[%c0_3, %c0_4] : memref<1x128xf32, #tpu.memory_space<vmem>>, vector<1x128xf32>
    %3 = arith.truncf %0 : vector<8x32xf32> to vector<8x32xbf16>
    %cst = arith.constant dense<0.000000e+00> : vector<8x128xf32>
    %4 = tpu.matmul %3, %1, %cst {dimension_numbers = #tpu.dot_dimension_numbers<[1], [0], [0], [1], [0, 0, 1, 1], [], []>} : vector<8x32xbf16>, vector<32x128xbf16>, vector<8x128xf32> -> vector<8x128xf32>
    %5 = vector.broadcast %2 : vector<1x128xf32> to vector<8x128xf32>
    %6 = arith.addf %4, %5 : vector<8x128xf32>
    %c0_5 = arith.constant 0 : index
    %c0_6 = arith.constant 0 : index
    %7 = vector.load %arg4[%c0_5, %c0_6] : memref<1x128xf32, #tpu.memory_space<vmem>>, vector<1x128xf32>
    %cst_7 = arith.constant 0.000000e+00 : f32
    %8 = vector.broadcast %cst_7 : f32 to vector<8x128xf32>
    %9 = arith.cmpf ogt, %6, %8 : vector<8x128xf32>
    %10 = vector.broadcast %7 : vector<1x128xf32> to vector<8x128xf32>
    %11 = arith.mulf %10, %6 : vector<8x128xf32>
    %12 = arith.select %9, %6, %11 : vector<8x128xi1>, vector<8x128xf32>
    %c0_8 = arith.constant 0 : index
    %c0_9 = arith.constant 0 : index
    %13 = vector.load %arg5[%c0_8, %c0_9] : memref<128x128xbf16, #tpu.memory_space<vmem>>, vector<128x128xbf16>
    %c0_10 = arith.constant 0 : index
    %c0_11 = arith.constant 0 : index
    %14 = vector.load %arg6[%c0_10, %c0_11] : memref<1x128xf32, #tpu.memory_space<vmem>>, vector<1x128xf32>
    %15 = arith.truncf %12 : vector<8x128xf32> to vector<8x128xbf16>
    %cst_12 = arith.constant dense<0.000000e+00> : vector<8x128xf32>
    %16 = tpu.matmul %15, %13, %cst_12 {dimension_numbers = #tpu.dot_dimension_numbers<[1], [0], [0], [1], [0, 0, 1, 1], [], []>} : vector<8x128xbf16>, vector<128x128xbf16>, vector<8x128xf32> -> vector<8x128xf32>
    %17 = vector.broadcast %14 : vector<1x128xf32> to vector<8x128xf32>
    %18 = arith.addf %16, %17 : vector<8x128xf32>
    %c0_13 = arith.constant 0 : index
    %c0_14 = arith.constant 0 : index
    %19 = vector.load %arg7[%c0_13, %c0_14] : memref<1x128xf32, #tpu.memory_space<vmem>>, vector<1x128xf32>
    %cst_15 = arith.constant 0.000000e+00 : f32
    %20 = vector.broadcast %cst_15 : f32 to vector<8x128xf32>
    %21 = arith.cmpf ogt, %18, %20 : vector<8x128xf32>
    %22 = vector.broadcast %19 : vector<1x128xf32> to vector<8x128xf32>
    %23 = arith.mulf %22, %18 : vector<8x128xf32>
    %24 = arith.select %21, %18, %23 : vector<8x128xi1>, vector<8x128xf32>
    %c0_16 = arith.constant 0 : index
    %c0_17 = arith.constant 0 : index
    %25 = vector.load %arg8[%c0_16, %c0_17] : memref<128x128xbf16, #tpu.memory_space<vmem>>, vector<128x128xbf16>
    %c0_18 = arith.constant 0 : index
    %c0_19 = arith.constant 0 : index
    %26 = vector.load %arg9[%c0_18, %c0_19] : memref<1x128xf32, #tpu.memory_space<vmem>>, vector<1x128xf32>
    %27 = arith.truncf %24 : vector<8x128xf32> to vector<8x128xbf16>
    %cst_20 = arith.constant dense<0.000000e+00> : vector<8x128xf32>
    %28 = tpu.matmul %27, %25, %cst_20 {dimension_numbers = #tpu.dot_dimension_numbers<[1], [0], [0], [1], [0, 0, 1, 1], [], []>} : vector<8x128xbf16>, vector<128x128xbf16>, vector<8x128xf32> -> vector<8x128xf32>
    %29 = vector.broadcast %26 : vector<1x128xf32> to vector<8x128xf32>
    %30 = arith.addf %28, %29 : vector<8x128xf32>
    %c0_21 = arith.constant 0 : index
    %c0_22 = arith.constant 0 : index
    %31 = vector.load %arg10[%c0_21, %c0_22] : memref<8x128xf32, #tpu.memory_space<vmem>>, vector<8x128xf32>
    tpu.vector_store %arg10[%c0_21, %c0_22], %30 {strides = array<i32>} : memref<8x128xf32, #tpu.memory_space<vmem>>, vector<8x128xf32>,
    return
  }
  func.func @transform_0(%arg0: i32) -> (i32, i32) {
    %c0_i32 = arith.constant 0 : i32
    %c0_i32_0 = arith.constant 0 : i32
    return %arg0, %c0_i32 : i32, i32
  }
  func.func @transform_1(%arg0: i32) -> (i32, i32) {
    %c0_i32 = arith.constant 0 : i32
    %c0_i32_0 = arith.constant 0 : i32
    %c0_i32_1 = arith.constant 0 : i32
    return %c0_i32, %c0_i32_0 : i32, i32
  }
  func.func @transform_2(%arg0: i32) -> (i32, i32) {
    %c0_i32 = arith.constant 0 : i32
    %c0_i32_0 = arith.constant 0 : i32
    %c0_i32_1 = arith.constant 0 : i32
    return %c0_i32, %c0_i32_0 : i32, i32
  }
  func.func @transform_3(%arg0: i32) -> (i32, i32) {
    %c0_i32 = arith.constant 0 : i32
    %c0_i32_0 = arith.constant 0 : i32
    %c0_i32_1 = arith.constant 0 : i32
    return %c0_i32, %c0_i32_0 : i32, i32
  }
  func.func @transform_4(%arg0: i32) -> (i32, i32) {
    %c0_i32 = arith.constant 0 : i32
    %c0_i32_0 = arith.constant 0 : i32
    %c0_i32_1 = arith.constant 0 : i32
    return %c0_i32, %c0_i32_0 : i32, i32
  }
  func.func @transform_5(%arg0: i32) -> (i32, i32) {
    %c0_i32 = arith.constant 0 : i32
    %c0_i32_0 = arith.constant 0 : i32
    %c0_i32_1 = arith.constant 0 : i32
    return %c0_i32, %c0_i32_0 : i32, i32
  }
  func.func @transform_6(%arg0: i32) -> (i32, i32) {
    %c0_i32 = arith.constant 0 : i32
    %c0_i32_0 = arith.constant 0 : i32
    %c0_i32_1 = arith.constant 0 : i32
    return %c0_i32, %c0_i32_0 : i32, i32
  }
  func.func @transform_7(%arg0: i32) -> (i32, i32) {
    %c0_i32 = arith.constant 0 : i32
    %c0_i32_0 = arith.constant 0 : i32
    %c0_i32_1 = arith.constant 0 : i32
    return %c0_i32, %c0_i32_0 : i32, i32
  }
  func.func @transform_8(%arg0: i32) -> (i32, i32) {
    %c0_i32 = arith.constant 0 : i32
    %c0_i32_0 = arith.constant 0 : i32
    %c0_i32_1 = arith.constant 0 : i32
    return %c0_i32, %c0_i32_0 : i32, i32
  }
  func.func @transform_9(%arg0: i32) -> (i32, i32) {
    %c0_i32 = arith.constant 0 : i32
    %c0_i32_0 = arith.constant 0 : i32
    return %arg0, %c0_i32 : i32, i32
  }
}

module attributes {stable_mosaic.version = 11 : i64} {
  func.func @kernel(%arg0: i32, %arg1: memref<8x32xf32, #tpu.memory_space<vmem>>, %arg2: memref<32x128xbf16, #tpu.memory_space<vmem>>, %arg3: memref<1x128xf32, #tpu.memory_space<vmem>>, %arg4: memref<1x128xf32, #tpu.memory_space<vmem>>, %arg5: memref<128x128xbf16, #tpu.memory_space<vmem>>, %arg6: memref<1x128xf32, #tpu.memory_space<vmem>>, %arg7: memref<1x128xf32, #tpu.memory_space<vmem>>, %arg8: memref<128x128xbf16, #tpu.memory_space<vmem>>, %arg9: memref<1x128xf32, #tpu.memory_space<vmem>>, %arg10: memref<8x128xf32, #tpu.memory_space<vmem>>) attributes {dimension_semantics = [#tpu.dimension_semantics<parallel>], iteration_bounds = array<i64: 1>, scalar_prefetch = 0 : i64, scratch_operands = 0 : i64, tpu.core_type = #tpu.core_type<tc>, window_params = [{transform_indices = @transform_0, window_bounds = array<i64: 8, 32>}, {pipeline_mode = #tpu.pipeline_mode<synchronous>, transform_indices = @transform_1, window_bounds = array<i64: 32, 128>}, {pipeline_mode = #tpu.pipeline_mode<synchronous>, transform_indices = @transform_2, window_bounds = array<i64: 1, 128>}, {pipeline_mode = #tpu.pipeline_mode<synchronous>, transform_indices = @transform_3, window_bounds = array<i64: 1, 128>}, {pipeline_mode = #tpu.pipeline_mode<synchronous>, transform_indices = @transform_4, window_bounds = array<i64: 128, 128>}, {pipeline_mode = #tpu.pipeline_mode<synchronous>, transform_indices = @transform_5, window_bounds = array<i64: 1, 128>}, {pipeline_mode = #tpu.pipeline_mode<synchronous>, transform_indices = @transform_6, window_bounds = array<i64: 1, 128>}, {pipeline_mode = #tpu.pipeline_mode<synchronous>, transform_indices = @transform_7, window_bounds = array<i64: 128, 128>}, {pipeline_mode = #tpu.pipeline_mode<synchronous>, transform_indices = @transform_8, window_bounds = array<i64: 1, 128>}, {transform_indices = @transform_9, window_bounds = array<i64: 8, 128>}]} {
    %c0 = arith.constant 0 : index
    %c0_0 = arith.constant 0 : index
    %0 = vector.load %arg1[%c0, %c0_0] : memref<8x32xf32, #tpu.memory_space<vmem>>, vector<8x32xf32>
    %c0_1 = arith.constant 0 : index
    %c0_2 = arith.constant 0 : index
    %1 = vector.load %arg2[%c0_1, %c0_2] : memref<32x128xbf16, #tpu.memory_space<vmem>>, vector<32x128xbf16>
    %c0_3 = arith.constant 0 : index
    %c0_4 = arith.constant 0 : index
    %2 = vector.load %arg3[%c0_3, %c0_4] : memref<1x128xf32, #tpu.memory_space<vmem>>, vector<1x128xf32>
    %3 = arith.truncf %0 : vector<8x32xf32> to vector<8x32xbf16>
    %cst = arith.constant dense<0.000000e+00> : vector<8x128xf32>
    %4 = tpu.matmul %3, %1, %cst {dimension_numbers = #tpu.dot_dimension_numbers<[1], [0], [0], [1], [0, 0, 1, 1], [], []>} : vector<8x32xbf16>, vector<32x128xbf16>, vector<8x128xf32> -> vector<8x128xf32>
    %5 = vector.broadcast %2 : vector<1x128xf32> to vector<8x128xf32>
    %6 = arith.addf %4, %5 : vector<8x128xf32>
    %c0_5 = arith.constant 0 : index
    %c0_6 = arith.constant 0 : index
    %7 = vector.load %arg4[%c0_5, %c0_6] : memref<1x128xf32, #tpu.memory_space<vmem>>, vector<1x128xf32>
    %cst_7 = arith.constant 0.000000e+00 : f32
    %8 = vector.broadcast %cst_7 : f32 to vector<8x128xf32>
    %9 = arith.cmpf ogt, %6, %8 : vector<8x128xf32>
    %10 = vector.broadcast %7 : vector<1x128xf32> to vector<8x128xf32>
    %11 = arith.mulf %10, %6 : vector<8x128xf32>
    %12 = arith.select %9, %6, %11 : vector<8x128xi1>, vector<8x128xf32>
    %c0_8 = arith.constant 0 : index
    %c0_9 = arith.constant 0 : index
    %13 = vector.load %arg5[%c0_8, %c0_9] : memref<128x128xbf16, #tpu.memory_space<vmem>>, vector<128x128xbf16>
    %c0_10 = arith.constant 0 : index
    %c0_11 = arith.constant 0 : index
    %14 = vector.load %arg6[%c0_10, %c0_11] : memref<1x128xf32, #tpu.memory_space<vmem>>, vector<1x128xf32>
    %15 = arith.truncf %12 : vector<8x128xf32> to vector<8x128xbf16>
    %cst_12 = arith.constant dense<0.000000e+00> : vector<8x128xf32>
    %16 = tpu.matmul %15, %13, %cst_12 {dimension_numbers = #tpu.dot_dimension_numbers<[1], [0], [0], [1], [0, 0, 1, 1], [], []>} : vector<8x128xbf16>, vector<128x128xbf16>, vector<8x128xf32> -> vector<8x128xf32>
    %17 = vector.broadcast %14 : vector<1x128xf32> to vector<8x128xf32>
    %18 = arith.addf %16, %17 : vector<8x128xf32>
    %c0_13 = arith.constant 0 : index
    %c0_14 = arith.constant 0 : index
    %19 = vector.load %arg7[%c0_13, %c0_14] : memref<1x128xf32, #tpu.memory_space<vmem>>, vector<1x128xf32>
    %cst_15 = arith.constant 0.000000e+00 : f32
    %20 = vector.broadcast %cst_15 : f32 to vector<8x128xf32>
    %21 = arith.cmpf ogt, %18, %20 : vector<8x128xf32>
    %22 = vector.broadcast %19 : vector<1x128xf32> to vector<8x128xf32>
    %23 = arith.mulf %22, %18 : vector<8x128xf32>
    %24 = arith.select %21, %18, %23 : vector<8x128xi1>, vector<8x128xf32>
    %c0_16 = arith.constant 0 : index
    %c0_17 = arith.constant 0 : index
    %25 = vector.load %arg8[%c0_16, %c0_17] : memref<128x128xbf16, #tpu.memory_space<vmem>>, vector<128x128xbf16>
    %c0_18 = arith.constant 0 : index
    %c0_19 = arith.constant 0 : index
    %26 = vector.load %arg9[%c0_18, %c0_19] : memref<1x128xf32, #tpu.memory_space<vmem>>, vector<1x128xf32>
    %27 = arith.truncf %24 : vector<8x128xf32> to vector<8x128xbf16>
    %cst_20 = arith.constant dense<0.000000e+00> : vector<8x128xf32>
    %28 = tpu.matmul %27, %25, %cst_20 {dimension_numbers = #tpu.dot_dimension_numbers<[1], [0], [0], [1], [0, 0, 1, 1], [], []>} : vector<8x128xbf16>, vector<128x128xbf16>, vector<8x128xf32> -> vector<8x128xf32>
    %29 = vector.broadcast %26 : vector<1x128xf32> to vector<8x128xf32>
    %30 = arith.addf %28, %29 : vector<8x128xf32>
    %c0_21 = arith.constant 0 : index
    %c0_22 = arith.constant 0 : index
    %31 = vector.load %arg10[%c0_21, %c0_22] : memref<8x128xf32, #tpu.memory_space<vmem>>, vector<8x128xf32>
    tpu.vector_store %arg10[%c0_21, %c0_22], %30 {strides = array<i32>} : memref<8x128xf32, #tpu.memory_space<vmem>>, vector<8x128xf32>,
    return
  }
  func.func @transform_0(%arg0: i32) -> (i32, i32) {
    %c0_i32 = arith.constant 0 : i32
    %c0_i32_0 = arith.constant 0 : i32
    return %arg0, %c0_i32 : i32, i32
  }
  func.func @transform_1(%arg0: i32) -> (i32, i32) {
    %c0_i32 = arith.constant 0 : i32
    %c0_i32_0 = arith.constant 0 : i32
    %c0_i32_1 = arith.constant 0 : i32
    return %c0_i32, %c0_i32_0 : i32, i32
  }
  func.func @transform_2(%arg0: i32) -> (i32, i32) {
    %c0_i32 = arith.constant 0 : i32
    %c0_i32_0 = arith.constant 0 : i32
    %c0_i32_1 = arith.constant 0 : i32
    return %c0_i32, %c0_i32_0 : i32, i32
  }
  func.func @transform_3(%arg0: i32) -> (i32, i32) {
    %c0_i32 = arith.constant 0 : i32
    %c0_i32_0 = arith.constant 0 : i32
    %c0_i32_1 = arith.constant 0 : i32
    return %c0_i32, %c0_i32_0 : i32, i32
  }
  func.func @transform_4(%arg0: i32) -> (i32, i32) {
    %c0_i32 = arith.constant 0 : i32
    %c0_i32_0 = arith.constant 0 : i32
    %c0_i32_1 = arith.constant 0 : i32
    return %c0_i32, %c0_i32_0 : i32, i32
  }
  func.func @transform_5(%arg0: i32) -> (i32, i32) {
    %c0_i32 = arith.constant 0 : i32
    %c0_i32_0 = arith.constant 0 : i32
    %c0_i32_1 = arith.constant 0 : i32
    return %c0_i32, %c0_i32_0 : i32, i32
  }
  func.func @transform_6(%arg0: i32) -> (i32, i32) {
    %c0_i32 = arith.constant 0 : i32
    %c0_i32_0 = arith.constant 0 : i32
    %c0_i32_1 = arith.constant 0 : i32
    return %c0_i32, %c0_i32_0 : i32, i32
  }
  func.func @transform_7(%arg0: i32) -> (i32, i32) {
    %c0_i32 = arith.constant 0 : i32
    %c0_i32_0 = arith.constant 0 : i32
    %c0_i32_1 = arith.constant 0 : i32
    return %c0_i32, %c0_i32_0 : i32, i32
  }
  func.func @transform_8(%arg0: i32) -> (i32, i32) {
    %c0_i32 = arith.constant 0 : i32
    %c0_i32_0 = arith.constant 0 : i32
    %c0_i32_1 = arith.constant 0 : i32
    return %c0_i32, %c0_i32_0 : i32, i32
  }
  func.func @transform_9(%arg0: i32) -> (i32, i32) {
    %c0_i32 = arith.constant 0 : i32
    %c0_i32_0 = arith.constant 0 : i32
    return %arg0, %c0_i32 : i32, i32
  }
}

</mosaic_0001>

<llo_original>
// kernel: tpu_custom_call.1
$region0: #{tpu_custom_call.1}
  #allocation0 [shape = 'u32[]', space=smem, size = 0x4, offset = 0x4, fixed_abs, tag = 'smem constant byte address 0x4 - core index']
  #allocation1 [shape = 'u32[144,128]{1,0:T(1,128)}', space=vmem, size = 0x12000, scoped, tag = 'internal scratch']
  %s0 = inlined_call_operand.hbm [shape: f32[8,32], index: 0, kind: input, shape index: {}]
  %s1 = inlined_call_operand.hbm [shape: bf16[32,128], index: 1, kind: input, shape index: {}]
  %s2 = inlined_call_operand.vmem [shape: f32[1,128], index: 2, kind: input, shape index: {}]
  %s3 = inlined_call_operand.vmem [shape: f32[1,128], index: 3, kind: input, shape index: {}]
  %s4 = inlined_call_operand.hbm [shape: bf16[128,128], index: 4, kind: input, shape index: {}]
  %s5 = inlined_call_operand.vmem [shape: f32[1,128], index: 5, kind: input, shape index: {}]
  %s6 = inlined_call_operand.vmem [shape: f32[1,128], index: 6, kind: input, shape index: {}]
  %s7 = inlined_call_operand.hbm [shape: bf16[128,128], index: 7, kind: input, shape index: {}]
  %s8 = inlined_call_operand.vmem [shape: f32[1,128], index: 8, kind: input, shape index: {}]
  %s9 = inlined_call_operand.hbm [shape: f32[8,128], index: 9, kind: output, shape index: {}]
  %s10 = sld [smem:[#allocation0]]
  $region62: #{tpu_custom_call.1} parent=0
    _
  %s12 = ssub.s32 1, %s10
  %s13 = scalar_select 0, %s12, %s10
  $region1: #{tpu_custom_call.1} parent=0
    #allocation2 [shape = 'u8[4096]{0}', space=vmem, size = 0x1000, scoped, tag = 'input window, operand 0, single buffered']
    #allocation3 [shape = 's32[1]{0}', space=sflag, size = 0x4, scoped, tag = 'scoped memory for tpu_custom_call.1']
    #allocation4 [shape = 's32[1]{0}', space=sflag, size = 0x4, scoped, tag = 'scoped memory for tpu_custom_call.1']
    #allocation5 [shape = 'u8[8192]{0}', space=vmem, size = 0x2000, scoped, tag = 'input window, operand 1, single buffered']
    #allocation6 [shape = 's32[1]{0}', space=sflag, size = 0x4, scoped, tag = 'scoped memory for tpu_custom_call.1']
    #allocation7 [shape = 'u8[32768]{0}', space=vmem, size = 0x8000, scoped, tag = 'input window, operand 4, single buffered']
    #allocation8 [shape = 'u8[32768]{0}', space=vmem, size = 0x8000, scoped, tag = 'input window, operand 7, single buffered']
    #allocation9 [shape = 's32[1]{0}', space=sflag, size = 0x4, scoped, tag = 'scoped memory for tpu_custom_call.1']
    #allocation10 [shape = 'u8[4096]{0}', space=vmem, size = 0x1000, scoped, tag = 'output window, operand 0, single buffered']
    %14 = vsyncpa [#allocation3], 0
    %15 = vsyncpa [#allocation6], 0
    %16 = vsyncpa [#allocation9], 0
    %17 = vsyncpa [#allocation4], 0
    // Predicated region
    $region2: #{tpu_custom_call.1} parent=1 // pred_check
      _
    $region3: #{tpu_custom_call.1} parent=1 // pred_check_branch
      %19 = sbr.rel (0) target = $region5
    $region4: #{tpu_custom_call.1} parent=1 // pred_region
      %s21 = ssub.s32 128, 128
      %22 = vsyncadd [#allocation3], %s21
      %s24 = sshll.u32 [#allocation2], 4
      %s25 = int_to_ptr.vmem [resolvable:$true] %s24
      %27 = dma.hbm_to_vmem [thread:$0]  %s0, 128, %s25, [#allocation3]
    $region5: #{tpu_custom_call.1} parent=1 // pred_fallthru
      _
    // Predicated region
    $region6: #{tpu_custom_call.1} parent=1 // pred_check
      _
    $region7: #{tpu_custom_call.1} parent=1 // pred_check_branch
      %29 = sbr.rel (0) target = $region9
    $region8: #{tpu_custom_call.1} parent=1 // pred_region
      %s31 = ssub.s32 256, 256
      %32 = vsyncadd [#allocation6], %s31
      %s33 = sshll.u32 [#allocation5], 4
      %s34 = int_to_ptr.vmem [resolvable:$true] %s33
      %39 = dma.hbm_to_vmem [thread:$0]  %s1, 256, %s34, [#allocation6], 64, 64, 4
    $region9: #{tpu_custom_call.1} parent=1 // pred_fallthru
      _
    // Predicated region
    $region10: #{tpu_custom_call.1} parent=1 // pred_check
      _
    $region11: #{tpu_custom_call.1} parent=1 // pred_check_branch
      %41 = sbr.rel (0) target = $region13
    $region12: #{tpu_custom_call.1} parent=1 // pred_region
      _
    $region13: #{tpu_custom_call.1} parent=1 // pred_fallthru
      _
    // Predicated region
    $region14: #{tpu_custom_call.1} parent=1 // pred_check
      _
    $region15: #{tpu_custom_call.1} parent=1 // pred_check_branch
      %43 = sbr.rel (0) target = $region17
    $region16: #{tpu_custom_call.1} parent=1 // pred_region
      _
    $region17: #{tpu_custom_call.1} parent=1 // pred_fallthru
      _
    // Predicated region
    $region18: #{tpu_custom_call.1} parent=1 // pred_check
      _
    $region19: #{tpu_custom_call.1} parent=1 // pred_check_branch
      %45 = sbr.rel (0) target = $region21
    $region20: #{tpu_custom_call.1} parent=1 // pred_region
      %s47 = ssub.s32 1024, 1024
      %48 = vsyncadd [#allocation6], %s47
      %s49 = sshll.u32 [#allocation7], 4
      %s50 = int_to_ptr.vmem [resolvable:$true] %s49
      %55 = dma.hbm_to_vmem [thread:$0]  %s4, 1024, %s50, [#allocation6], 64, 64, 4
    $region21: #{tpu_custom_call.1} parent=1 // pred_fallthru
      _
    // Predicated region
    $region22: #{tpu_custom_call.1} parent=1 // pred_check
      _
    $region23: #{tpu_custom_call.1} parent=1 // pred_check_branch
      %57 = sbr.rel (0) target = $region25
    $region24: #{tpu_custom_call.1} parent=1 // pred_region
      _
    $region25: #{tpu_custom_call.1} parent=1 // pred_fallthru
      _
    // Predicated region
    $region26: #{tpu_custom_call.1} parent=1 // pred_check
      _
    $region27: #{tpu_custom_call.1} parent=1 // pred_check_branch
      %59 = sbr.rel (0) target = $region29
    $region28: #{tpu_custom_call.1} parent=1 // pred_region
      _
    $region29: #{tpu_custom_call.1} parent=1 // pred_fallthru
      _
    // Predicated region
    $region30: #{tpu_custom_call.1} parent=1 // pred_check
      _
    $region31: #{tpu_custom_call.1} parent=1 // pred_check_branch
      %61 = sbr.rel (0) target = $region33
    $region32: #{tpu_custom_call.1} parent=1 // pred_region
      %s63 = ssub.s32 1024, 1024
      %64 = vsyncadd [#allocation9], %s63
      %s65 = sshll.u32 [#allocation8], 4
      %s66 = int_to_ptr.vmem [resolvable:$true] %s65
      %71 = dma.hbm_to_vmem [thread:$0]  %s7, 1024, %s66, [#allocation9], 64, 64, 4
    $region33: #{tpu_custom_call.1} parent=1 // pred_fallthru
      _
    // Predicated region
    $region34: #{tpu_custom_call.1} parent=1 // pred_check
      _
    $region35: #{tpu_custom_call.1} parent=1 // pred_check_branch
      %73 = sbr.rel (0) target = $region37
    $region36: #{tpu_custom_call.1} parent=1 // pred_region
      _
    $region37: #{tpu_custom_call.1} parent=1 // pred_fallthru
      _
    // Predicated region
    $region38: #{tpu_custom_call.1} parent=1 // pred_check
      _
    $region39: #{tpu_custom_call.1} parent=1 // pred_check_branch
      %75 = sbr.rel (0) target = $region41
    $region40: #{tpu_custom_call.1} parent=1 // pred_region
      %76 = dma.done [#allocation3], 128
    $region41: #{tpu_custom_call.1} parent=1 // pred_fallthru
      _
    // Predicated region
    $region42: #{tpu_custom_call.1} parent=1 // pred_check
      _
    $region43: #{tpu_custom_call.1} parent=1 // pred_check_branch
      %78 = sbr.rel (0) target = $region45
    $region44: #{tpu_custom_call.1} parent=1 // pred_region
      %79 = dma.done [#allocation6], 256
    $region45: #{tpu_custom_call.1} parent=1 // pred_fallthru
      _
    // Predicated region
    $region46: #{tpu_custom_call.1} parent=1 // pred_check
      _
    $region47: #{tpu_custom_call.1} parent=1 // pred_check_branch
      %81 = sbr.rel (0) target = $region49
    $region48: #{tpu_custom_call.1} parent=1 // pred_region
      %82 = dma.done [#allocation6], 1024
    $region49: #{tpu_custom_call.1} parent=1 // pred_fallthru
      _
    // Predicated region
    $region50: #{tpu_custom_call.1} parent=1 // pred_check
      _
    $region51: #{tpu_custom_call.1} parent=1 // pred_check_branch
      %84 = sbr.rel (0) target = $region53
    $region52: #{tpu_custom_call.1} parent=1 // pred_region
      %85 = dma.done [#allocation9], 1024
    $region53: #{tpu_custom_call.1} parent=1 // pred_fallthru
      _
    %v87 = vld [vmem:[#allocation2] sm:$0xff]
    %v88 = vld [vmem:[#allocation5] sm:$0xf]
    %v89 = vld [vmem:[#allocation5 + $0x4] sm:$0xf]
    %v90 = vld [vmem:[#allocation5 + $0x8] sm:$0xf]
    %v91 = vld [vmem:[#allocation5 + $0xc] sm:$0xf]
    %v92 = vld [vmem:[%s2] sm:$0x1]
    %v93 = vpack.c.bf16 %v87, %v87
    %v95 = vlaneseq
    %v96 = vshrl.u32 %v95, 7
    %v97 = vsub.s32 0, %v96
    %v98 = vrot.slane %v92, %v97
    %v104 = vunpack.c.l.b16 %v88
    %v105 = vunpack.c.l.b16 %v89
    %v106 = vunpack.c.l.b16 %v90
    %v107 = vunpack.c.l.b16 %v91
    %v108 = vpack.c.b16 %v105, %v104
    %v109 = vpack.c.b16 %v107, %v106
    %vm112 = vcmask 261120
    %v114 = vsel %vm112, %v93, 0
    %116 = vmatprep.subr.bf16.mxu0 0
    %117 = vmatpush1.bf16.msra.mxu0 %v108
    %118 = vmatprep.subr.bf16.mxu0 0
    %119 = vmatpush1.bf16.msra.mxu0 %v109
    %120 = vmatprep.subr.bf16.mxu0 0
    %121 = vmatpush1.bf16.msra.mxu0 0
    %122 = vmatprep.subr.bf16.mxu0 0
    %123 = vmatpush1.bf16.msra.mxu0 0
    %124 = vmatprep.subr.bf16.mxu0 0
    %125 = vmatpush1.bf16.msra.mxu0 0
    %126 = vmatprep.subr.bf16.mxu0 0
    %127 = vmatpush1.bf16.msra.mxu0 0
    %128 = vmatprep.subr.bf16.mxu0 0
    %129 = vmatpush1.bf16.msra.mxu0 0
    %130 = vmatprep.subr.bf16.mxu0 0
    %131 = vmatpush1.bf16.msra.mxu0 0
    %132 = vmatprep.subr.bf16.mxu0 0
    %133 = vmatpush1.bf16.msra.mxu0 0
    %134 = vmatprep.subr.bf16.mxu0 0
    %135 = vmatpush1.bf16.msra.mxu0 0
    %136 = vmatprep.subr.bf16.mxu0 0
    %137 = vmatpush1.bf16.msra.mxu0 0
    %138 = vmatprep.subr.bf16.mxu0 0
    %139 = vmatpush1.bf16.msra.mxu0 0
    %140 = vmatprep.subr.bf16.mxu0 0
    %141 = vmatpush1.bf16.msra.mxu0 0
    %142 = vmatprep.subr.bf16.mxu0 0
    %143 = vmatpush1.bf16.msra.mxu0 0
    %144 = vmatprep.subr.bf16.mxu0 0
    %145 = vmatpush1.bf16.msra.mxu0 0
    %146 = vmatprep.subr.bf16.mxu0 0
    %147 = vmatpush1.bf16.msra.mxu0 0
    %148 = vmatprep.mubr.bf16.mxu0 0
    %149 = vmatmul.mubr.bf16.gmra.mrb[0].mxu0 %v114
    %v150 = vpop.f32.mrb[0].mxu0
    %v151 = vadd.f32 %v98, %v150
    %v152 = vpop.f32.mrb[0].mxu0
    %v153 = vpop.f32.mrb[0].mxu0
    %v154 = vpop.f32.mrb[0].mxu0
    %155 = vdwg.mxu0
    %v156 = vld [vmem:[%s3] sm:$0x1]
    %vm157 = vcmp.gt.f32.partialorder %v151, 0.0
    %v159 = vlaneseq
    %v160 = vshrl.u32 %v159, 7
    %v161 = vsub.s32 0, %v160
    %v162 = vrot.slane %v156, %v161
    %v164 = vmul.f32 %v162, %v151
    %v165 = vsel %vm157, %v151, %v164
    %v166 = vld [vmem:[#allocation7] sm:$0xf]
    %v167 = vld [vmem:[#allocation7 + $0x4] sm:$0xf]
    %v168 = vld [vmem:[#allocation7 + $0x8] sm:$0xf]
    %v169 = vld [vmem:[#allocation7 + $0xc] sm:$0xf]
    %v170 = vld [vmem:[#allocation7 + $0x10] sm:$0xf]
    %v171 = vld [vmem:[#allocation7 + $0x14] sm:$0xf]
    %v172 = vld [vmem:[#allocation7 + $0x18] sm:$0xf]
    %v173 = vld [vmem:[#allocation7 + $0x1c] sm:$0xf]
    %v174 = vld [vmem:[#allocation7 + $0x20] sm:$0xf]
    %v175 = vld [vmem:[#allocation7 + $0x24] sm:$0xf]
    %v176 = vld [vmem:[#allocation7 + $0x28] sm:$0xf]
    %v177 = vld [vmem:[#allocation7 + $0x2c] sm:$0xf]
    %v178 = vld [vmem:[#allocation7 + $0x30] sm:$0xf]
    %v179 = vld [vmem:[#allocation7 + $0x34] sm:$0xf]
    %v180 = vld [vmem:[#allocation7 + $0x38] sm:$0xf]
    %v181 = vld [vmem:[#allocation7 + $0x3c] sm:$0xf]
    %v182 = vld [vmem:[%s5] sm:$0x1]
    %v183 = vpack.c.bf16 %v165, %v165
    %v185 = vlaneseq
    %v186 = vshrl.u32 %v185, 7
    %v187 = vsub.s32 0, %v186
    %v188 = vrot.slane %v182, %v187
    %v206 = vunpack.c.l.b16 %v166
    %v207 = vunpack.c.l.b16 %v167
    %v208 = vunpack.c.l.b16 %v168
    %v209 = vunpack.c.l.b16 %v169
    %v210 = vunpack.c.l.b16 %v170
    %v211 = vunpack.c.l.b16 %v171
    %v212 = vunpack.c.l.b16 %v172
    %v213 = vunpack.c.l.b16 %v173
    %v214 = vunpack.c.l.b16 %v174
    %v215 = vunpack.c.l.b16 %v175
    %v216 = vunpack.c.l.b16 %v176
    %v217 = vunpack.c.l.b16 %v177
    %v218 = vunpack.c.l.b16 %v178
    %v219 = vunpack.c.l.b16 %v179
    %v220 = vunpack.c.l.b16 %v180
    %v221 = vunpack.c.l.b16 %v181
    %v222 = vpack.c.b16 %v207, %v206
    %v223 = vpack.c.b16 %v209, %v208
    %v224 = vpack.c.b16 %v211, %v210
    %v225 = vpack.c.b16 %v213, %v212
    %v226 = vpack.c.b16 %v215, %v214
    %v227 = vpack.c.b16 %v217, %v216
    %v228 = vpack.c.b16 %v219, %v218
    %v229 = vpack.c.b16 %v221, %v220
    %238 = vmatprep.subr.bf16.mxu0 0
    %239 = vmatpush1.bf16.msra.mxu0 %v222
    %240 = vmatprep.subr.bf16.mxu0 0
    %241 = vmatpush1.bf16.msra.mxu0 %v223
    %242 = vmatprep.subr.bf16.mxu0 0
    %243 = vmatpush1.bf16.msra.mxu0 %v224
    %244 = vmatprep.subr.bf16.mxu0 0
    %245 = vmatpush1.bf16.msra.mxu0 %v225
    %246 = vmatprep.subr.bf16.mxu0 0
    %247 = vmatpush1.bf16.msra.mxu0 %v226
    %248 = vmatprep.subr.bf16.mxu0 0
    %249 = vmatpush1.bf16.msra.mxu0 %v227
    %250 = vmatprep.subr.bf16.mxu0 0
    %251 = vmatpush1.bf16.msra.mxu0 %v228
    %252 = vmatprep.subr.bf16.mxu0 0
    %253 = vmatpush1.bf16.msra.mxu0 %v229
    %254 = vmatprep.subr.bf16.mxu0 0
    %255 = vmatpush1.bf16.msra.mxu0 0
    %256 = vmatprep.subr.bf16.mxu0 0
    %257 = vmatpush1.bf16.msra.mxu0 0
    %258 = vmatprep.subr.bf16.mxu0 0
    %259 = vmatpush1.bf16.msra.mxu0 0
    %260 = vmatprep.subr.bf16.mxu0 0
    %261 = vmatpush1.bf16.msra.mxu0 0
    %262 = vmatprep.subr.bf16.mxu0 0
    %263 = vmatpush1.bf16.msra.mxu0 0
    %264 = vmatprep.subr.bf16.mxu0 0
    %265 = vmatpush1.bf16.msra.mxu0 0
    %266 = vmatprep.subr.bf16.mxu0 0
    %267 = vmatpush1.bf16.msra.mxu0 0
    %268 = vmatprep.subr.bf16.mxu0 0
    %269 = vmatpush1.bf16.msra.mxu0 0
    %270 = vmatprep.mubr.bf16.mxu0 0
    %271 = vmatmul.mubr.bf16.gmra.mrb[0].mxu0 %v183
    %v272 = vpop.f32.mrb[0].mxu0
    %v273 = vadd.f32 %v188, %v272
    %v274 = vpop.f32.mrb[0].mxu0
    %v275 = vpop.f32.mrb[0].mxu0
    %v276 = vpop.f32.mrb[0].mxu0
    %277 = vdwg.mxu0
    %v278 = vld [vmem:[%s6] sm:$0x1]
    %vm279 = vcmp.gt.f32.partialorder %v273, 0.0
    %v281 = vlaneseq
    %v282 = vshrl.u32 %v281, 7
    %v283 = vsub.s32 0, %v282
    %v284 = vrot.slane %v278, %v283
    %v286 = vmul.f32 %v284, %v273
    %v287 = vsel %vm279, %v273, %v286
    %v288 = vld [vmem:[#allocation8] sm:$0xf]
    %v289 = vld [vmem:[#allocation8 + $0x4] sm:$0xf]
    %v290 = vld [vmem:[#allocation8 + $0x8] sm:$0xf]
    %v291 = vld [vmem:[#allocation8 + $0xc] sm:$0xf]
    %v292 = vld [vmem:[#allocation8 + $0x10] sm:$0xf]
    %v293 = vld [vmem:[#allocation8 + $0x14] sm:$0xf]
    %v294 = vld [vmem:[#allocation8 + $0x18] sm:$0xf]
    %v295 = vld [vmem:[#allocation8 + $0x1c] sm:$0xf]
    %v296 = vld [vmem:[#allocation8 + $0x20] sm:$0xf]
    %v297 = vld [vmem:[#allocation8 + $0x24] sm:$0xf]
    %v298 = vld [vmem:[#allocation8 + $0x28] sm:$0xf]
    %v299 = vld [vmem:[#allocation8 + $0x2c] sm:$0xf]
    %v300 = vld [vmem:[#allocation8 + $0x30] sm:$0xf]
    %v301 = vld [vmem:[#allocation8 + $0x34] sm:$0xf]
    %v302 = vld [vmem:[#allocation8 + $0x38] sm:$0xf]
    %v303 = vld [vmem:[#allocation8 + $0x3c] sm:$0xf]
    %v304 = vld [vmem:[%s8] sm:$0x1]
    %v305 = vpack.c.bf16 %v287, %v287
    %v307 = vlaneseq
    %v308 = vshrl.u32 %v307, 7
    %v309 = vsub.s32 0, %v308
    %v310 = vrot.slane %v304, %v309
    %v328 = vunpack.c.l.b16 %v288
    %v329 = vunpack.c.l.b16 %v289
    %v330 = vunpack.c.l.b16 %v290
    %v331 = vunpack.c.l.b16 %v291
    %v332 = vunpack.c.l.b16 %v292
    %v333 = vunpack.c.l.b16 %v293
    %v334 = vunpack.c.l.b16 %v294
    %v335 = vunpack.c.l.b16 %v295
    %v336 = vunpack.c.l.b16 %v296
    %v337 = vunpack.c.l.b16 %v297
    %v338 = vunpack.c.l.b16 %v298
    %v339 = vunpack.c.l.b16 %v299
    %v340 = vunpack.c.l.b16 %v300
    %v341 = vunpack.c.l.b16 %v301
    %v342 = vunpack.c.l.b16 %v302
    %v343 = vunpack.c.l.b16 %v303
    %v344 = vpack.c.b16 %v329, %v328
    %v345 = vpack.c.b16 %v331, %v330
    %v346 = vpack.c.b16 %v333, %v332
    %v347 = vpack.c.b16 %v335, %v334
    %v348 = vpack.c.b16 %v337, %v336
    %v349 = vpack.c.b16 %v339, %v338
    %v350 = vpack.c.b16 %v341, %v340
    %v351 = vpack.c.b16 %v343, %v342
    %360 = vmatprep.subr.bf16.mxu0 0
    %361 = vmatpush1.bf16.msra.mxu0 %v344
    %362 = vmatprep.subr.bf16.mxu0 0
    %363 = vmatpush1.bf16.msra.mxu0 %v345
    %364 = vmatprep.subr.bf16.mxu0 0
    %365 = vmatpush1.bf16.msra.mxu0 %v346
    %366 = vmatprep.subr.bf16.mxu0 0
    %367 = vmatpush1.bf16.msra.mxu0 %v347
    %368 = vmatprep.subr.bf16.mxu0 0
    %369 = vmatpush1.bf16.msra.mxu0 %v348
    %370 = vmatprep.subr.bf16.mxu0 0
    %371 = vmatpush1.bf16.msra.mxu0 %v349
    %372 = vmatprep.subr.bf16.mxu0 0
    %373 = vmatpush1.bf16.msra.mxu0 %v350
    %374 = vmatprep.subr.bf16.mxu0 0
    %375 = vmatpush1.bf16.msra.mxu0 %v351
    %376 = vmatprep.subr.bf16.mxu0 0
    %377 = vmatpush1.bf16.msra.mxu0 0
    %378 = vmatprep.subr.bf16.mxu0 0
    %379 = vmatpush1.bf16.msra.mxu0 0
    %380 = vmatprep.subr.bf16.mxu0 0
    %381 = vmatpush1.bf16.msra.mxu0 0
    %382 = vmatprep.subr.bf16.mxu0 0
    %383 = vmatpush1.bf16.msra.mxu0 0
    %384 = vmatprep.subr.bf16.mxu0 0
    %385 = vmatpush1.bf16.msra.mxu0 0
    %386 = vmatprep.subr.bf16.mxu0 0
    %387 = vmatpush1.bf16.msra.mxu0 0
    %388 = vmatprep.subr.bf16.mxu0 0
    %389 = vmatpush1.bf16.msra.mxu0 0
    %390 = vmatprep.subr.bf16.mxu0 0
    %391 = vmatpush1.bf16.msra.mxu0 0
    %392 = vmatprep.mubr.bf16.mxu0 0
    %393 = vmatmul.mubr.bf16.gmra.mrb[0].mxu0 %v305
    %v394 = vpop.f32.mrb[0].mxu0
    %v395 = vadd.f32 %v310, %v394
    %v396 = vpop.f32.mrb[0].mxu0
    %v397 = vpop.f32.mrb[0].mxu0
    %v398 = vpop.f32.mrb[0].mxu0
    %399 = vdwg.mxu0
    %400 = vst [vmem:[#allocation10] sm:$0xff] %v395
    // Predicated region
    $region54: #{tpu_custom_call.1} parent=1 // pred_check
      _
    $region55: #{tpu_custom_call.1} parent=1 // pred_check_branch
      %402 = sbr.rel (0) target = $region57
    $region56: #{tpu_custom_call.1} parent=1 // pred_region
      %s404 = ssub.s32 128, 128
      %405 = vsyncadd [#allocation4], %s404
      %s407 = sshll.u32 [#allocation10], 4
      %s408 = int_to_ptr.vmem [resolvable:$true] %s407
      %410 = dma.vmem_to_hbm [thread:$0]  %s408, 128, %s9, [#allocation4]
    $region57: #{tpu_custom_call.1} parent=1 // pred_fallthru
      _
    // Predicated region
    $region58: #{tpu_custom_call.1} parent=1 // pred_check
      _
    $region59: #{tpu_custom_call.1} parent=1 // pred_check_branch
      %412 = sbr.rel (0) target = $region61
    $region60: #{tpu_custom_call.1} parent=1 // pred_region
      %413 = dma.done [#allocation4], 128
    $region61: #{tpu_custom_call.1} parent=1 // pred_fallthru
      _
    %414 = vsyncpa [#allocation3], 1
    %415 = vsyncpa [#allocation6], 1
    %416 = vsyncpa [#allocation9], 1
    %417 = vsyncpa [#allocation4], 1

// kernel: tpu_custom_call.1
$region0: #{tpu_custom_call.1}
  #allocation0 [shape = 'u32[]', space=smem, size = 0x4, offset = 0x4, fixed_abs, tag = 'smem constant byte address 0x4 - core index']
  #allocation1 [shape = 'u32[144,128]{1,0:T(1,128)}', space=vmem, size = 0x12000, scoped, tag = 'internal scratch']
  %s0 = inlined_call_operand.hbm [shape: f32[8,32], index: 0, kind: input, shape index: {}]
  %s1 = inlined_call_operand.hbm [shape: bf16[32,128], index: 1, kind: input, shape index: {}]
  %s2 = inlined_call_operand.vmem [shape: f32[1,128], index: 2, kind: input, shape index: {}]
  %s3 = inlined_call_operand.vmem [shape: f32[1,128], index: 3, kind: input, shape index: {}]
  %s4 = inlined_call_operand.hbm [shape: bf16[128,128], index: 4, kind: input, shape index: {}]
  %s5 = inlined_call_operand.vmem [shape: f32[1,128], index: 5, kind: input, shape index: {}]
  %s6 = inlined_call_operand.vmem [shape: f32[1,128], index: 6, kind: input, shape index: {}]
  %s7 = inlined_call_operand.hbm [shape: bf16[128,128], index: 7, kind: input, shape index: {}]
  %s8 = inlined_call_operand.vmem [shape: f32[1,128], index: 8, kind: input, shape index: {}]
  %s9 = inlined_call_operand.hbm [shape: f32[8,128], index: 9, kind: output, shape index: {}]
  %s10 = sld [smem:[#allocation0]]
  $region62: #{tpu_custom_call.1} parent=0
    _
  %s12 = ssub.s32 1, %s10
  %s13 = scalar_select 0, %s12, %s10
  $region1: #{tpu_custom_call.1} parent=0
    #allocation2 [shape = 'u8[4096]{0}', space=vmem, size = 0x1000, scoped, tag = 'input window, operand 0, single buffered']
    #allocation3 [shape = 's32[1]{0}', space=sflag, size = 0x4, scoped, tag = 'scoped memory for tpu_custom_call.1']
    #allocation4 [shape = 's32[1]{0}', space=sflag, size = 0x4, scoped, tag = 'scoped memory for tpu_custom_call.1']
    #allocation5 [shape = 'u8[8192]{0}', space=vmem, size = 0x2000, scoped, tag = 'input window, operand 1, single buffered']
    #allocation6 [shape = 's32[1]{0}', space=sflag, size = 0x4, scoped, tag = 'scoped memory for tpu_custom_call.1']
    #allocation7 [shape = 'u8[32768]{0}', space=vmem, size = 0x8000, scoped, tag = 'input window, operand 4, single buffered']
    #allocation8 [shape = 'u8[32768]{0}', space=vmem, size = 0x8000, scoped, tag = 'input window, operand 7, single buffered']
    #allocation9 [shape = 's32[1]{0}', space=sflag, size = 0x4, scoped, tag = 'scoped memory for tpu_custom_call.1']
    #allocation10 [shape = 'u8[4096]{0}', space=vmem, size = 0x1000, scoped, tag = 'output window, operand 0, single buffered']
    %14 = vsyncpa [#allocation3], 0
    %15 = vsyncpa [#allocation6], 0
    %16 = vsyncpa [#allocation9], 0
    %17 = vsyncpa [#allocation4], 0
    // Predicated region
    $region2: #{tpu_custom_call.1} parent=1 // pred_check
      _
    $region3: #{tpu_custom_call.1} parent=1 // pred_check_branch
      %19 = sbr.rel (0) target = $region5
    $region4: #{tpu_custom_call.1} parent=1 // pred_region
      %s21 = ssub.s32 128, 128
      %22 = vsyncadd [#allocation3], %s21
      %s24 = sshll.u32 [#allocation2], 4
      %s25 = int_to_ptr.vmem [resolvable:$true] %s24
      %27 = dma.hbm_to_vmem [thread:$0]  %s0, 128, %s25, [#allocation3]
    $region5: #{tpu_custom_call.1} parent=1 // pred_fallthru
      _
    // Predicated region
    $region6: #{tpu_custom_call.1} parent=1 // pred_check
      _
    $region7: #{tpu_custom_call.1} parent=1 // pred_check_branch
      %29 = sbr.rel (0) target = $region9
    $region8: #{tpu_custom_call.1} parent=1 // pred_region
      %s31 = ssub.s32 256, 256
      %32 = vsyncadd [#allocation6], %s31
      %s33 = sshll.u32 [#allocation5], 4
      %s34 = int_to_ptr.vmem [resolvable:$true] %s33
      %39 = dma.hbm_to_vmem [thread:$0]  %s1, 256, %s34, [#allocation6], 64, 64, 4
    $region9: #{tpu_custom_call.1} parent=1 // pred_fallthru
      _
    // Predicated region
    $region10: #{tpu_custom_call.1} parent=1 // pred_check
      _
    $region11: #{tpu_custom_call.1} parent=1 // pred_check_branch
      %41 = sbr.rel (0) target = $region13
    $region12: #{tpu_custom_call.1} parent=1 // pred_region
      _
    $region13: #{tpu_custom_call.1} parent=1 // pred_fallthru
      _
    // Predicated region
    $region14: #{tpu_custom_call.1} parent=1 // pred_check
      _
    $region15: #{tpu_custom_call.1} parent=1 // pred_check_branch
      %43 = sbr.rel (0) target = $region17
    $region16: #{tpu_custom_call.1} parent=1 // pred_region
      _
    $region17: #{tpu_custom_call.1} parent=1 // pred_fallthru
      _
    // Predicated region
    $region18: #{tpu_custom_call.1} parent=1 // pred_check
      _
    $region19: #{tpu_custom_call.1} parent=1 // pred_check_branch
      %45 = sbr.rel (0) target = $region21
    $region20: #{tpu_custom_call.1} parent=1 // pred_region
      %s47 = ssub.s32 1024, 1024
      %48 = vsyncadd [#allocation6], %s47
      %s49 = sshll.u32 [#allocation7], 4
      %s50 = int_to_ptr.vmem [resolvable:$true] %s49
      %55 = dma.hbm_to_vmem [thread:$0]  %s4, 1024, %s50, [#allocation6], 64, 64, 4
    $region21: #{tpu_custom_call.1} parent=1 // pred_fallthru
      _
    // Predicated region
    $region22: #{tpu_custom_call.1} parent=1 // pred_check
      _
    $region23: #{tpu_custom_call.1} parent=1 // pred_check_branch
      %57 = sbr.rel (0) target = $region25
    $region24: #{tpu_custom_call.1} parent=1 // pred_region
      _
    $region25: #{tpu_custom_call.1} parent=1 // pred_fallthru
      _
    // Predicated region
    $region26: #{tpu_custom_call.1} parent=1 // pred_check
      _
    $region27: #{tpu_custom_call.1} parent=1 // pred_check_branch
      %59 = sbr.rel (0) target = $region29
    $region28: #{tpu_custom_call.1} parent=1 // pred_region
      _
    $region29: #{tpu_custom_call.1} parent=1 // pred_fallthru
      _
    // Predicated region
    $region30: #{tpu_custom_call.1} parent=1 // pred_check
      _
    $region31: #{tpu_custom_call.1} parent=1 // pred_check_branch
      %61 = sbr.rel (0) target = $region33
    $region32: #{tpu_custom_call.1} parent=1 // pred_region
      %s63 = ssub.s32 1024, 1024
      %64 = vsyncadd [#allocation9], %s63
      %s65 = sshll.u32 [#allocation8], 4
      %s66 = int_to_ptr.vmem [resolvable:$true] %s65
      %71 = dma.hbm_to_vmem [thread:$0]  %s7, 1024, %s66, [#allocation9], 64, 64, 4
    $region33: #{tpu_custom_call.1} parent=1 // pred_fallthru
      _
    // Predicated region
    $region34: #{tpu_custom_call.1} parent=1 // pred_check
      _
    $region35: #{tpu_custom_call.1} parent=1 // pred_check_branch
      %73 = sbr.rel (0) target = $region37
    $region36: #{tpu_custom_call.1} parent=1 // pred_region
      _
    $region37: #{tpu_custom_call.1} parent=1 // pred_fallthru
      _
    // Predicated region
    $region38: #{tpu_custom_call.1} parent=1 // pred_check
      _
    $region39: #{tpu_custom_call.1} parent=1 // pred_check_branch
      %75 = sbr.rel (0) target = $region41
    $region40: #{tpu_custom_call.1} parent=1 // pred_region
      %76 = dma.done [#allocation3], 128
    $region41: #{tpu_custom_call.1} parent=1 // pred_fallthru
      _
    // Predicated region
    $region42: #{tpu_custom_call.1} parent=1 // pred_check
      _
    $region43: #{tpu_custom_call.1} parent=1 // pred_check_branch
      %78 = sbr.rel (0) target = $region45
    $region44: #{tpu_custom_call.1} parent=1 // pred_region
      %79 = dma.done [#allocation6], 256
    $region45: #{tpu_custom_call.1} parent=1 // pred_fallthru
      _
    // Predicated region
    $region46: #{tpu_custom_call.1} parent=1 // pred_check
      _
    $region47: #{tpu_custom_call.1} parent=1 // pred_check_branch
      %81 = sbr.rel (0) target = $region49
    $region48: #{tpu_custom_call.1} parent=1 // pred_region
      %82 = dma.done [#allocation6], 1024
    $region49: #{tpu_custom_call.1} parent=1 // pred_fallthru
      _
    // Predicated region
    $region50: #{tpu_custom_call.1} parent=1 // pred_check
      _
    $region51: #{tpu_custom_call.1} parent=1 // pred_check_branch
      %84 = sbr.rel (0) target = $region53
    $region52: #{tpu_custom_call.1} parent=1 // pred_region
      %85 = dma.done [#allocation9], 1024
    $region53: #{tpu_custom_call.1} parent=1 // pred_fallthru
      _
    %v87 = vld [vmem:[#allocation2] sm:$0xff]
    %v88 = vld [vmem:[#allocation5] sm:$0xf]
    %v89 = vld [vmem:[#allocation5 + $0x4] sm:$0xf]
    %v90 = vld [vmem:[#allocation5 + $0x8] sm:$0xf]
    %v91 = vld [vmem:[#allocation5 + $0xc] sm:$0xf]
    %v92 = vld [vmem:[%s2] sm:$0x1]
    %v93 = vpack.c.bf16 %v87, %v87
    %v95 = vlaneseq
    %v96 = vshrl.u32 %v95, 7
    %v97 = vsub.s32 0, %v96
    %v98 = vrot.slane %v92, %v97
    %v104 = vunpack.c.l.b16 %v88
    %v105 = vunpack.c.l.b16 %v89
    %v106 = vunpack.c.l.b16 %v90
    %v107 = vunpack.c.l.b16 %v91
    %v108 = vpack.c.b16 %v105, %v104
    %v109 = vpack.c.b16 %v107, %v106
    %vm112 = vcmask 261120
    %v114 = vsel %vm112, %v93, 0
    %116 = vmatprep.subr.bf16.mxu0 0
    %117 = vmatpush1.bf16.msra.mxu0 %v108
    %118 = vmatprep.subr.bf16.mxu0 0
    %119 = vmatpush1.bf16.msra.mxu0 %v109
    %120 = vmatprep.subr.bf16.mxu0 0
    %121 = vmatpush1.bf16.msra.mxu0 0
    %122 = vmatprep.subr.bf16.mxu0 0
    %123 = vmatpush1.bf16.msra.mxu0 0
    %124 = vmatprep.subr.bf16.mxu0 0
    %125 = vmatpush1.bf16.msra.mxu0 0
    %126 = vmatprep.subr.bf16.mxu0 0
    %127 = vmatpush1.bf16.msra.mxu0 0
    %128 = vmatprep.subr.bf16.mxu0 0
    %129 = vmatpush1.bf16.msra.mxu0 0
    %130 = vmatprep.subr.bf16.mxu0 0
    %131 = vmatpush1.bf16.msra.mxu0 0
    %132 = vmatprep.subr.bf16.mxu0 0
    %133 = vmatpush1.bf16.msra.mxu0 0
    %134 = vmatprep.subr.bf16.mxu0 0
    %135 = vmatpush1.bf16.msra.mxu0 0
    %136 = vmatprep.subr.bf16.mxu0 0
    %137 = vmatpush1.bf16.msra.mxu0 0
    %138 = vmatprep.subr.bf16.mxu0 0
    %139 = vmatpush1.bf16.msra.mxu0 0
    %140 = vmatprep.subr.bf16.mxu0 0
    %141 = vmatpush1.bf16.msra.mxu0 0
    %142 = vmatprep.subr.bf16.mxu0 0
    %143 = vmatpush1.bf16.msra.mxu0 0
    %144 = vmatprep.subr.bf16.mxu0 0
    %145 = vmatpush1.bf16.msra.mxu0 0
    %146 = vmatprep.subr.bf16.mxu0 0
    %147 = vmatpush1.bf16.msra.mxu0 0
    %148 = vmatprep.mubr.bf16.mxu0 0
    %149 = vmatmul.mubr.bf16.gmra.mrb[0].mxu0 %v114
    %v150 = vpop.f32.mrb[0].mxu0
    %v151 = vadd.f32 %v98, %v150
    %v152 = vpop.f32.mrb[0].mxu0
    %v153 = vpop.f32.mrb[0].mxu0
    %v154 = vpop.f32.mrb[0].mxu0
    %155 = vdwg.mxu0
    %v156 = vld [vmem:[%s3] sm:$0x1]
    %vm157 = vcmp.gt.f32.partialorder %v151, 0.0
    %v159 = vlaneseq
    %v160 = vshrl.u32 %v159, 7
    %v161 = vsub.s32 0, %v160
    %v162 = vrot.slane %v156, %v161
    %v164 = vmul.f32 %v162, %v151
    %v165 = vsel %vm157, %v151, %v164
    %v166 = vld [vmem:[#allocation7] sm:$0xf]
    %v167 = vld [vmem:[#allocation7 + $0x4] sm:$0xf]
    %v168 = vld [vmem:[#allocation7 + $0x8] sm:$0xf]
    %v169 = vld [vmem:[#allocation7 + $0xc] sm:$0xf]
    %v170 = vld [vmem:[#allocation7 + $0x10] sm:$0xf]
    %v171 = vld [vmem:[#allocation7 + $0x14] sm:$0xf]
    %v172 = vld [vmem:[#allocation7 + $0x18] sm:$0xf]
    %v173 = vld [vmem:[#allocation7 + $0x1c] sm:$0xf]
    %v174 = vld [vmem:[#allocation7 + $0x20] sm:$0xf]
    %v175 = vld [vmem:[#allocation7 + $0x24] sm:$0xf]
    %v176 = vld [vmem:[#allocation7 + $0x28] sm:$0xf]
    %v177 = vld [vmem:[#allocation7 + $0x2c] sm:$0xf]
    %v178 = vld [vmem:[#allocation7 + $0x30] sm:$0xf]
    %v179 = vld [vmem:[#allocation7 + $0x34] sm:$0xf]
    %v180 = vld [vmem:[#allocation7 + $0x38] sm:$0xf]
    %v181 = vld [vmem:[#allocation7 + $0x3c] sm:$0xf]
    %v182 = vld [vmem:[%s5] sm:$0x1]
    %v183 = vpack.c.bf16 %v165, %v165
    %v185 = vlaneseq
    %v186 = vshrl.u32 %v185, 7
    %v187 = vsub.s32 0, %v186
    %v188 = vrot.slane %v182, %v187
    %v206 = vunpack.c.l.b16 %v166
    %v207 = vunpack.c.l.b16 %v167
    %v208 = vunpack.c.l.b16 %v168
    %v209 = vunpack.c.l.b16 %v169
    %v210 = vunpack.c.l.b16 %v170
    %v211 = vunpack.c.l.b16 %v171
    %v212 = vunpack.c.l.b16 %v172
    %v213 = vunpack.c.l.b16 %v173
    %v214 = vunpack.c.l.b16 %v174
    %v215 = vunpack.c.l.b16 %v175
    %v216 = vunpack.c.l.b16 %v176
    %v217 = vunpack.c.l.b16 %v177
    %v218 = vunpack.c.l.b16 %v178
    %v219 = vunpack.c.l.b16 %v179
    %v220 = vunpack.c.l.b16 %v180
    %v221 = vunpack.c.l.b16 %v181
    %v222 = vpack.c.b16 %v207, %v206
    %v223 = vpack.c.b16 %v209, %v208
    %v224 = vpack.c.b16 %v211, %v210
    %v225 = vpack.c.b16 %v213, %v212
    %v226 = vpack.c.b16 %v215, %v214
    %v227 = vpack.c.b16 %v217, %v216
    %v228 = vpack.c.b16 %v219, %v218
    %v229 = vpack.c.b16 %v221, %v220
    %238 = vmatprep.subr.bf16.mxu0 0
    %239 = vmatpush1.bf16.msra.mxu0 %v222
    %240 = vmatprep.subr.bf16.mxu0 0
    %241 = vmatpush1.bf16.msra.mxu0 %v223
    %242 = vmatprep.subr.bf16.mxu0 0
    %243 = vmatpush1.bf16.msra.mxu0 %v224
    %244 = vmatprep.subr.bf16.mxu0 0
    %245 = vmatpush1.bf16.msra.mxu0 %v225
    %246 = vmatprep.subr.bf16.mxu0 0
    %247 = vmatpush1.bf16.msra.mxu0 %v226
    %248 = vmatprep.subr.bf16.mxu0 0
    %249 = vmatpush1.bf16.msra.mxu0 %v227
    %250 = vmatprep.subr.bf16.mxu0 0
    %251 = vmatpush1.bf16.msra.mxu0 %v228
    %252 = vmatprep.subr.bf16.mxu0 0
    %253 = vmatpush1.bf16.msra.mxu0 %v229
    %254 = vmatprep.subr.bf16.mxu0 0
    %255 = vmatpush1.bf16.msra.mxu0 0
    %256 = vmatprep.subr.bf16.mxu0 0
    %257 = vmatpush1.bf16.msra.mxu0 0
    %258 = vmatprep.subr.bf16.mxu0 0
    %259 = vmatpush1.bf16.msra.mxu0 0
    %260 = vmatprep.subr.bf16.mxu0 0
    %261 = vmatpush1.bf16.msra.mxu0 0
    %262 = vmatprep.subr.bf16.mxu0 0
    %263 = vmatpush1.bf16.msra.mxu0 0
    %264 = vmatprep.subr.bf16.mxu0 0
    %265 = vmatpush1.bf16.msra.mxu0 0
    %266 = vmatprep.subr.bf16.mxu0 0
    %267 = vmatpush1.bf16.msra.mxu0 0
    %268 = vmatprep.subr.bf16.mxu0 0
    %269 = vmatpush1.bf16.msra.mxu0 0
    %270 = vmatprep.mubr.bf16.mxu0 0
    %271 = vmatmul.mubr.bf16.gmra.mrb[0].mxu0 %v183
    %v272 = vpop.f32.mrb[0].mxu0
    %v273 = vadd.f32 %v188, %v272
    %v274 = vpop.f32.mrb[0].mxu0
    %v275 = vpop.f32.mrb[0].mxu0
    %v276 = vpop.f32.mrb[0].mxu0
    %277 = vdwg.mxu0
    %v278 = vld [vmem:[%s6] sm:$0x1]
    %vm279 = vcmp.gt.f32.partialorder %v273, 0.0
    %v281 = vlaneseq
    %v282 = vshrl.u32 %v281, 7
    %v283 = vsub.s32 0, %v282
    %v284 = vrot.slane %v278, %v283
    %v286 = vmul.f32 %v284, %v273
    %v287 = vsel %vm279, %v273, %v286
    %v288 = vld [vmem:[#allocation8] sm:$0xf]
    %v289 = vld [vmem:[#allocation8 + $0x4] sm:$0xf]
    %v290 = vld [vmem:[#allocation8 + $0x8] sm:$0xf]
    %v291 = vld [vmem:[#allocation8 + $0xc] sm:$0xf]
    %v292 = vld [vmem:[#allocation8 + $0x10] sm:$0xf]
    %v293 = vld [vmem:[#allocation8 + $0x14] sm:$0xf]
    %v294 = vld [vmem:[#allocation8 + $0x18] sm:$0xf]
    %v295 = vld [vmem:[#allocation8 + $0x1c] sm:$0xf]
    %v296 = vld [vmem:[#allocation8 + $0x20] sm:$0xf]
    %v297 = vld [vmem:[#allocation8 + $0x24] sm:$0xf]
    %v298 = vld [vmem:[#allocation8 + $0x28] sm:$0xf]
    %v299 = vld [vmem:[#allocation8 + $0x2c] sm:$0xf]
    %v300 = vld [vmem:[#allocation8 + $0x30] sm:$0xf]
    %v301 = vld [vmem:[#allocation8 + $0x34] sm:$0xf]
    %v302 = vld [vmem:[#allocation8 + $0x38] sm:$0xf]
    %v303 = vld [vmem:[#allocation8 + $0x3c] sm:$0xf]
    %v304 = vld [vmem:[%s8] sm:$0x1]
    %v305 = vpack.c.bf16 %v287, %v287
    %v307 = vlaneseq
    %v308 = vshrl.u32 %v307, 7
    %v309 = vsub.s32 0, %v308
    %v310 = vrot.slane %v304, %v309
    %v328 = vunpack.c.l.b16 %v288
    %v329 = vunpack.c.l.b16 %v289
    %v330 = vunpack.c.l.b16 %v290
    %v331 = vunpack.c.l.b16 %v291
    %v332 = vunpack.c.l.b16 %v292
    %v333 = vunpack.c.l.b16 %v293
    %v334 = vunpack.c.l.b16 %v294
    %v335 = vunpack.c.l.b16 %v295
    %v336 = vunpack.c.l.b16 %v296
    %v337 = vunpack.c.l.b16 %v297
    %v338 = vunpack.c.l.b16 %v298
    %v339 = vunpack.c.l.b16 %v299
    %v340 = vunpack.c.l.b16 %v300
    %v341 = vunpack.c.l.b16 %v301
    %v342 = vunpack.c.l.b16 %v302
    %v343 = vunpack.c.l.b16 %v303
    %v344 = vpack.c.b16 %v329, %v328
    %v345 = vpack.c.b16 %v331, %v330
    %v346 = vpack.c.b16 %v333, %v332
    %v347 = vpack.c.b16 %v335, %v334
    %v348 = vpack.c.b16 %v337, %v336
    %v349 = vpack.c.b16 %v339, %v338
    %v350 = vpack.c.b16 %v341, %v340
    %v351 = vpack.c.b16 %v343, %v342
    %360 = vmatprep.subr.bf16.mxu0 0
    %361 = vmatpush1.bf16.msra.mxu0 %v344
    %362 = vmatprep.subr.bf16.mxu0 0
    %363 = vmatpush1.bf16.msra.mxu0 %v345
    %364 = vmatprep.subr.bf16.mxu0 0
    %365 = vmatpush1.bf16.msra.mxu0 %v346
    %366 = vmatprep.subr.bf16.mxu0 0
    %367 = vmatpush1.bf16.msra.mxu0 %v347
    %368 = vmatprep.subr.bf16.mxu0 0
    %369 = vmatpush1.bf16.msra.mxu0 %v348
    %370 = vmatprep.subr.bf16.mxu0 0
    %371 = vmatpush1.bf16.msra.mxu0 %v349
    %372 = vmatprep.subr.bf16.mxu0 0
    %373 = vmatpush1.bf16.msra.mxu0 %v350
    %374 = vmatprep.subr.bf16.mxu0 0
    %375 = vmatpush1.bf16.msra.mxu0 %v351
    %376 = vmatprep.subr.bf16.mxu0 0
    %377 = vmatpush1.bf16.msra.mxu0 0
    %378 = vmatprep.subr.bf16.mxu0 0
    %379 = vmatpush1.bf16.msra.mxu0 0
    %380 = vmatprep.subr.bf16.mxu0 0
    %381 = vmatpush1.bf16.msra.mxu0 0
    %382 = vmatprep.subr.bf16.mxu0 0
    %383 = vmatpush1.bf16.msra.mxu0 0
    %384 = vmatprep.subr.bf16.mxu0 0
    %385 = vmatpush1.bf16.msra.mxu0 0
    %386 = vmatprep.subr.bf16.mxu0 0
    %387 = vmatpush1.bf16.msra.mxu0 0
    %388 = vmatprep.subr.bf16.mxu0 0
    %389 = vmatpush1.bf16.msra.mxu0 0
    %390 = vmatprep.subr.bf16.mxu0 0
    %391 = vmatpush1.bf16.msra.mxu0 0
    %392 = vmatprep.mubr.bf16.mxu0 0
    %393 = vmatmul.mubr.bf16.gmra.mrb[0].mxu0 %v305
    %v394 = vpop.f32.mrb[0].mxu0
    %v395 = vadd.f32 %v310, %v394
    %v396 = vpop.f32.mrb[0].mxu0
    %v397 = vpop.f32.mrb[0].mxu0
    %v398 = vpop.f32.mrb[0].mxu0
    %399 = vdwg.mxu0
    %400 = vst [vmem:[#allocation10] sm:$0xff] %v395
    // Predicated region
    $region54: #{tpu_custom_call.1} parent=1 // pred_check
      _
    $region55: #{tpu_custom_call.1} parent=1 // pred_check_branch
      %402 = sbr.rel (0) target = $region57
    $region56: #{tpu_custom_call.1} parent=1 // pred_region
      %s404 = ssub.s32 128, 128
      %405 = vsyncadd [#allocation4], %s404
      %s407 = sshll.u32 [#allocation10], 4
      %s408 = int_to_ptr.vmem [resolvable:$true] %s407
      %410 = dma.vmem_to_hbm [thread:$0]  %s408, 128, %s9, [#allocation4]
    $region57: #{tpu_custom_call.1} parent=1 // pred_fallthru
      _
    // Predicated region
    $region58: #{tpu_custom_call.1} parent=1 // pred_check
      _
    $region59: #{tpu_custom_call.1} parent=1 // pred_check_branch
      %412 = sbr.rel (0) target = $region61
    $region60: #{tpu_custom_call.1} parent=1 // pred_region
      %413 = dma.done [#allocation4], 128
    $region61: #{tpu_custom_call.1} parent=1 // pred_fallthru
      _
    %414 = vsyncpa [#allocation3], 1
    %415 = vsyncpa [#allocation6], 1
    %416 = vsyncpa [#allocation9], 1
    %417 = vsyncpa [#allocation4], 1

</llo_original>
